<compile_context>
chip_gen: v6e
topology: v6e:2x2x1
jax: 0.10.0
libtpu: 0.0.40
codegen_flags: <defaults>
</compile_context>

<pallas_src>
import jax
import jax.numpy as jnp
import numpy as np
from jax.experimental import pallas as pl
from jax.experimental.pallas import tpu as pltpu


# ----------------------------- Pallas kernel --------------------------------

def u6_policy_kernel(x_ref, w1_ref, b1_ref, w2_ref, b2_ref,
                     wp1_ref, bp1_ref, wp2_ref, bp2_ref,
                     wh_ref, bh_ref, out_ref):
    """x: (TB, 14) f32; W*: bf16; b*: f32. out: (TB, 32) f32."""
    x = x_ref[...].astype(jnp.bfloat16)

    def layer(a, w_ref, b_ref):
        z = jnp.dot(a, w_ref[...], preferred_element_type=jnp.float32) + b_ref[...]
        return jnp.maximum(z, 0.0).astype(jnp.bfloat16)

    h = layer(x, w1_ref, b1_ref)        # fused (block-diagonal) encoders, layer 1
    h = layer(h, w2_ref, b2_ref)        # fused encoders, layer 2
    p = layer(h, wp1_ref, bp1_ref)      # policy layer 1
    p = layer(p, wp2_ref, bp2_ref)      # policy layer 2

    # all four heads fused into one matmul; columns 21..31 are zero padding
    logits = (jnp.dot(p, wh_ref[...], preferred_element_type=jnp.float32)
              + bh_ref[...])            # (TB, 32) f32

    lane = jax.lax.broadcasted_iota(jnp.int32, logits.shape, 1)
    m_assign = lane < 6
    m_divide = (lane >= 6) & (lane < 12)
    m_prio = (lane >= 12) & (lane < 15)
    m_collab = (lane >= 15) & (lane < 21)
    m_soft = lane < 15

    neg = jnp.float32(-1e30)

    def group_max(m):
        return jnp.max(jnp.where(m, logits, neg), axis=-1, keepdims=True)

    # per-lane "my group's max", then a single exp over the whole slab
    row_max = jnp.where(m_assign, group_max(m_assign),
                        jnp.where(m_divide, group_max(m_divide),
                                  group_max(m_prio)))
    e = jnp.exp(jnp.where(m_soft, logits - row_max, neg))  # 0 outside softmax lanes

    def group_inv_sum(m):
        s = jnp.sum(jnp.where(m, e, 0.0), axis=-1, keepdims=True)
        return pl.reciprocal(s, approx=True)

    inv = jnp.where(m_assign, group_inv_sum(m_assign),
                    jnp.where(m_divide, group_inv_sum(m_divide),
                              group_inv_sum(m_prio)))
    probs = e * inv                                         # grouped softmaxes

    # sigmoid head via EUP tanh: sigmoid(z) = 0.5 * (tanh(z/2) + 1)
    sig = jnp.where(m_collab, 0.5 * (jnp.tanh(0.5 * logits) + 1.0), 0.0)

    out_ref[...] = probs + sig                              # one lane-dense store


# ----------------------------- wrapper ---------------------------------------

def u6_high_level_policy(task, uav, region, time_f, params, *, block_b=1024):
    x = jnp.concatenate([task, uav, region, time_f], axis=1).astype(jnp.float32)
    B = x.shape[0]

    weights = (params["W1"], params["b1"], params["W2"], params["b2"],
               params["Wp1"], params["bp1"], params["Wp2"], params["bp2"],
               params["Wh"], params["bh"])

    if B <= block_b:
        # Single invocation, no grid: everything fits in VMEM, no 1-step
        # pipeline machinery.
        vmem = pl.BlockSpec(memory_space=pltpu.MemorySpace.VMEM)
        out = pl.pallas_call(
            u6_policy_kernel,
            out_shape=jax.ShapeDtypeStruct((B, 32), jnp.float32),
            in_specs=[vmem] * (1 + len(weights)),
            out_specs=vmem,
        )(x, *weights)
    else:
        # Batch-tiled grid; weights stay resident in VMEM (constant index map).
        nb = pl.cdiv(B, block_b)
        Bp = nb * block_b
        if Bp != B:
            x = jnp.pad(x, ((0, Bp - B), (0, 0)))
        w_specs = [pl.BlockSpec(w.shape, lambda i: (0, 0)) for w in weights]
        out = pl.pallas_call(
            u6_policy_kernel,
            grid=(nb,),
            in_specs=[pl.BlockSpec((block_b, x.shape[1]), lambda i: (i, 0))]
                     + w_specs,
            out_specs=pl.BlockSpec((block_b, 32), lambda i: (i, 0)),
            out_shape=jax.ShapeDtypeStruct((Bp, 32), jnp.float32),
            compiler_params=pltpu.CompilerParams(
                dimension_semantics=("parallel",)),
        )(x, *weights)
        out = out[:B]

    return {
        "assign_probs": out[:, 0:6],
        "divide_probs": out[:, 6:12],
        "priority_probs": out[:, 12:15],
        "collaboration_probs": out[:, 15:21],
    }


# ------------------------ deterministic parameter init ----------------------

def _linear_params(key, fan_in, fan_out):
    # mimic torch.nn.Linear default init: U(-1/sqrt(fan_in), 1/sqrt(fan_in))
    kw, kb = jax.random.split(key)
    bound = 1.0 / np.sqrt(fan_in)
    W = jax.random.uniform(kw, (fan_in, fan_out), jnp.float32, -bound, bound)
    b = jax.random.uniform(kb, (1, fan_out), jnp.float32, -bound, bound)
    return W, b


def init_params(key,
                task_dim=64, uav_dim=32, region_dim=32, time_dim=16,
                hidden=256, num_uavs=6, num_regions=6, num_prio=3,
                head_pad=32):
    keys = jax.random.split(key, 14)
    tW1, tb1 = _linear_params(keys[0], 5, task_dim)
    tW2, tb2 = _linear_params(keys[1], task_dim, task_dim)
    uW1, ub1 = _linear_params(keys[2], 4, uav_dim)
    uW2, ub2 = _linear_params(keys[3], uav_dim, uav_dim)
    rW1, rb1 = _linear_params(keys[4], 3, region_dim)
    rW2, rb2 = _linear_params(keys[5], region_dim, region_dim)
    mW1, mb1 = _linear_params(keys[6], 2, time_dim)
    mW2, mb2 = _linear_params(keys[7], time_dim, time_dim)

    comb = task_dim + uav_dim + region_dim + time_dim        # 144
    pW1, pb1 = _linear_params(keys[8], comb, hidden)
    pW2, pb2 = _linear_params(keys[9], hidden, hidden)

    aW, ab = _linear_params(keys[10], hidden, num_uavs)
    dW, db = _linear_params(keys[11], hidden, num_regions)
    sW, sb = _linear_params(keys[12], hidden, num_prio)
    cW, cb = _linear_params(keys[13], hidden, num_uavs)

    in_dims = [5, 4, 3, 2]
    out_dims = [task_dim, uav_dim, region_dim, time_dim]

    # block-diagonal fused encoder layer 1: (14, 144)
    W1 = jnp.zeros((sum(in_dims), comb), jnp.float32)
    ro = co = 0
    for blk, fi, fo in zip([tW1, uW1, rW1, mW1], in_dims, out_dims):
        W1 = W1.at[ro:ro + fi, co:co + fo].set(blk)
        ro += fi
        co += fo
    b1 = jnp.concatenate([tb1, ub1, rb1, mb1], axis=1)

    # block-diagonal fused encoder layer 2: (144, 144)
    W2 = jnp.zeros((comb, comb), jnp.float32)
    o = 0
    for blk, fo in zip([tW2, uW2, rW2, mW2], out_dims):
        W2 = W2.at[o:o + fo, o:o + fo].set(blk)
        o += fo
    b2 = jnp.concatenate([tb2, ub2, rb2, mb2], axis=1)

    # fused heads, lane-padded to head_pad (=32): (256, 32)
    Wh = jnp.concatenate([aW, dW, sW, cW], axis=1)           # (256, 21)
    bh = jnp.concatenate([ab, db, sb, cb], axis=1)           # (1, 21)
    n_heads = Wh.shape[1]
    Wh = jnp.pad(Wh, ((0, 0), (0, head_pad - n_heads)))
    bh = jnp.pad(bh, ((0, 0), (0, head_pad - n_heads)))

    bf16 = jnp.bfloat16
    return dict(W1=W1.astype(bf16), b1=b1, W2=W2.astype(bf16), b2=b2,
                Wp1=pW1.astype(bf16), bp1=pb1, Wp2=pW2.astype(bf16), bp2=pb2,
                Wh=Wh.astype(bf16), bh=bh)


# ----------------------------- reference (pure JAX) --------------------------

def reference_forward(task, uav, region, time_f, params):
    """Matches the kernel's dtype behavior (bf16 operands, f32 accumulate)."""
    x = jnp.concatenate([task, uav, region, time_f], axis=1).astype(jnp.bfloat16)

    def layer(a, W, b):
        z = jnp.dot(a, W, preferred_element_type=jnp.float32) + b
        return jnp.maximum(z, 0.0).astype(jnp.bfloat16)

    h = layer(x, params["W1"], params["b1"])
    h = layer(h, params["W2"], params["b2"])
    p = layer(h, params["Wp1"], params["bp1"])
    p = layer(p, params["Wp2"], params["bp2"])
    logits = (jnp.dot(p, params["Wh"], preferred_element_type=jnp.float32)
              + params["bh"])
    return {
        "assign_probs": jax.nn.softmax(logits[:, 0:6], axis=-1),
        "divide_probs": jax.nn.softmax(logits[:, 6:12], axis=-1),
        "priority_probs": jax.nn.softmax(logits[:, 12:15], axis=-1),
        "collaboration_probs": jax.nn.sigmoid(logits[:, 15:21]),
    }


# ----------------------------- main ------------------------------------------

def _check(out, ref):
    for name in ("assign_probs", "divide_probs", "priority_probs",
                 "collaboration_probs"):
        np.testing.assert_allclose(np.asarray(out[name]), np.asarray(ref[name]),
                                   rtol=2e-2, atol=2e-3)


if __name__ == "__main__":
    key = jax.random.PRNGKey(0)
    k_task, k_uav, k_region, k_time, k_param = jax.random.split(key, 5)

    params = init_params(k_param)

    # ---- small batch: single un-gridded invocation ----
    B = 2
    task_features = jax.random.normal(k_task, (B, 5), jnp.float32)
    uav_features = jax.random.normal(k_uav, (B, 4), jnp.float32)
    region_features = jax.random.normal(k_region, (B, 3), jnp.float32)
    time_features = jax.random.normal(k_time, (B, 2), jnp.float32)

    out = u6_high_level_policy(task_features, uav_features,
                               region_features, time_features, params)
    jax.block_until_ready(out)
    ref = reference_forward(task_features, uav_features,
                            region_features, time_features, params)
    _check(out, ref)

    # ---- batch-tiled ("parallel" grid) path, still small shapes ----
    B2 = 40
    k2 = jax.random.split(jax.random.PRNGKey(1), 4)
    t2 = jax.random.normal(k2[0], (B2, 5), jnp.float32)
    u2 = jax.random.normal(k2[1], (B2, 4), jnp.float32)
    r2 = jax.random.normal(k2[2], (B2, 3), jnp.float32)
    m2 = jax.random.normal(k2[3], (B2, 2), jnp.float32)

    out2 = u6_high_level_policy(t2, u2, r2, m2, params, block_b=16)
    jax.block_until_ready(out2)
    ref2 = reference_forward(t2, u2, r2, m2, params)
    _check(out2, ref2)

    print("KERNEL_OK")
</pallas_src>

<mosaic_0001>
module attributes {stable_mosaic.version = 11 : i64} {
  func.func @u6_policy_kernel(%arg0: memref<2x14xf32, #tpu.memory_space<vmem>>, %arg1: memref<14x144xbf16, #tpu.memory_space<vmem>>, %arg2: memref<1x144xf32, #tpu.memory_space<vmem>>, %arg3: memref<144x144xbf16, #tpu.memory_space<vmem>>, %arg4: memref<1x144xf32, #tpu.memory_space<vmem>>, %arg5: memref<144x256xbf16, #tpu.memory_space<vmem>>, %arg6: memref<1x256xf32, #tpu.memory_space<vmem>>, %arg7: memref<256x256xbf16, #tpu.memory_space<vmem>>, %arg8: memref<1x256xf32, #tpu.memory_space<vmem>>, %arg9: memref<256x32xbf16, #tpu.memory_space<vmem>>, %arg10: memref<1x32xf32, #tpu.memory_space<vmem>>, %arg11: memref<2x32xf32, #tpu.memory_space<vmem>>) attributes {dimension_semantics = [], scalar_prefetch = 0 : i64, scratch_operands = 0 : i64, tpu.core_type = #tpu.core_type<tc>} {
    %c0 = arith.constant 0 : index
    %c0_0 = arith.constant 0 : index
    %0 = vector.load %arg0[%c0, %c0_0] : memref<2x14xf32, #tpu.memory_space<vmem>>, vector<2x14xf32>
    %1 = arith.truncf %0 : vector<2x14xf32> to vector<2x14xbf16>
    %c0_1 = arith.constant 0 : index
    %c0_2 = arith.constant 0 : index
    %2 = vector.load %arg1[%c0_1, %c0_2] : memref<14x144xbf16, #tpu.memory_space<vmem>>, vector<14x144xbf16>
    %cst = arith.constant dense<0.000000e+00> : vector<2x144xf32>
    %3 = tpu.matmul %1, %2, %cst {dimension_numbers = #tpu.dot_dimension_numbers<[1], [0], [0], [1], [0, 0, 1, 1], [], []>} : vector<2x14xbf16>, vector<14x144xbf16>, vector<2x144xf32> -> vector<2x144xf32>
    %c0_3 = arith.constant 0 : index
    %c0_4 = arith.constant 0 : index
    %4 = vector.load %arg2[%c0_3, %c0_4] : memref<1x144xf32, #tpu.memory_space<vmem>>, vector<1x144xf32>
    %5 = vector.broadcast %4 : vector<1x144xf32> to vector<2x144xf32>
    %6 = arith.addf %3, %5 : vector<2x144xf32>
    %cst_5 = arith.constant 0.000000e+00 : f32
    %7 = vector.broadcast %cst_5 : f32 to vector<2x144xf32>
    %8 = arith.maximumf %6, %7 : vector<2x144xf32>
    %9 = arith.truncf %8 : vector<2x144xf32> to vector<2x144xbf16>
    %c0_6 = arith.constant 0 : index
    %c0_7 = arith.constant 0 : index
    %10 = vector.load %arg3[%c0_6, %c0_7] : memref<144x144xbf16, #tpu.memory_space<vmem>>, vector<144x144xbf16>
    %cst_8 = arith.constant dense<0.000000e+00> : vector<2x144xf32>
    %11 = tpu.matmul %9, %10, %cst_8 {dimension_numbers = #tpu.dot_dimension_numbers<[1], [0], [0], [1], [0, 0, 1, 1], [], []>} : vector<2x144xbf16>, vector<144x144xbf16>, vector<2x144xf32> -> vector<2x144xf32>
    %c0_9 = arith.constant 0 : index
    %c0_10 = arith.constant 0 : index
    %12 = vector.load %arg4[%c0_9, %c0_10] : memref<1x144xf32, #tpu.memory_space<vmem>>, vector<1x144xf32>
    %13 = vector.broadcast %12 : vector<1x144xf32> to vector<2x144xf32>
    %14 = arith.addf %11, %13 : vector<2x144xf32>
    %cst_11 = arith.constant 0.000000e+00 : f32
    %15 = vector.broadcast %cst_11 : f32 to vector<2x144xf32>
    %16 = arith.maximumf %14, %15 : vector<2x144xf32>
    %17 = arith.truncf %16 : vector<2x144xf32> to vector<2x144xbf16>
    %c0_12 = arith.constant 0 : index
    %c0_13 = arith.constant 0 : index
    %18 = vector.load %arg5[%c0_12, %c0_13] : memref<144x256xbf16, #tpu.memory_space<vmem>>, vector<144x256xbf16>
    %cst_14 = arith.constant dense<0.000000e+00> : vector<2x256xf32>
    %19 = tpu.matmul %17, %18, %cst_14 {dimension_numbers = #tpu.dot_dimension_numbers<[1], [0], [0], [1], [0, 0, 1, 1], [], []>} : vector<2x144xbf16>, vector<144x256xbf16>, vector<2x256xf32> -> vector<2x256xf32>
    %c0_15 = arith.constant 0 : index
    %c0_16 = arith.constant 0 : index
    %20 = vector.load %arg6[%c0_15, %c0_16] : memref<1x256xf32, #tpu.memory_space<vmem>>, vector<1x256xf32>
    %21 = vector.broadcast %20 : vector<1x256xf32> to vector<2x256xf32>
    %22 = arith.addf %19, %21 : vector<2x256xf32>
    %cst_17 = arith.constant 0.000000e+00 : f32
    %23 = vector.broadcast %cst_17 : f32 to vector<2x256xf32>
    %24 = arith.maximumf %22, %23 : vector<2x256xf32>
    %25 = arith.truncf %24 : vector<2x256xf32> to vector<2x256xbf16>
    %c0_18 = arith.constant 0 : index
    %c0_19 = arith.constant 0 : index
    %26 = vector.load %arg7[%c0_18, %c0_19] : memref<256x256xbf16, #tpu.memory_space<vmem>>, vector<256x256xbf16>
    %cst_20 = arith.constant dense<0.000000e+00> : vector<2x256xf32>
    %27 = tpu.matmul %25, %26, %cst_20 {dimension_numbers = #tpu.dot_dimension_numbers<[1], [0], [0], [1], [0, 0, 1, 1], [], []>} : vector<2x256xbf16>, vector<256x256xbf16>, vector<2x256xf32> -> vector<2x256xf32>
    %c0_21 = arith.constant 0 : index
    %c0_22 = arith.constant 0 : index
    %28 = vector.load %arg8[%c0_21, %c0_22] : memref<1x256xf32, #tpu.memory_space<vmem>>, vector<1x256xf32>
    %29 = vector.broadcast %28 : vector<1x256xf32> to vector<2x256xf32>
    %30 = arith.addf %27, %29 : vector<2x256xf32>
    %cst_23 = arith.constant 0.000000e+00 : f32
    %31 = vector.broadcast %cst_23 : f32 to vector<2x256xf32>
    %32 = arith.maximumf %30, %31 : vector<2x256xf32>
    %33 = arith.truncf %32 : vector<2x256xf32> to vector<2x256xbf16>
    %c0_24 = arith.constant 0 : index
    %c0_25 = arith.constant 0 : index
    %34 = vector.load %arg9[%c0_24, %c0_25] : memref<256x32xbf16, #tpu.memory_space<vmem>>, vector<256x32xbf16>
    %cst_26 = arith.constant dense<0.000000e+00> : vector<2x32xf32>
    %35 = tpu.matmul %33, %34, %cst_26 {dimension_numbers = #tpu.dot_dimension_numbers<[1], [0], [0], [1], [0, 0, 1, 1], [], []>} : vector<2x256xbf16>, vector<256x32xbf16>, vector<2x32xf32> -> vector<2x32xf32>
    %c0_27 = arith.constant 0 : index
    %c0_28 = arith.constant 0 : index
    %36 = vector.load %arg10[%c0_27, %c0_28] : memref<1x32xf32, #tpu.memory_space<vmem>>, vector<1x32xf32>
    %37 = vector.broadcast %36 : vector<1x32xf32> to vector<2x32xf32>
    %38 = arith.addf %35, %37 : vector<2x32xf32>
    %39 = tpu.iota {dimensions = array<i32: 1>} : vector<2x32xi32>
    %c6_i32 = arith.constant 6 : i32
    %40 = vector.broadcast %c6_i32 : i32 to vector<2x32xi32>
    %41 = arith.cmpi slt, %39, %40 : vector<2x32xi32>
    %c6_i32_29 = arith.constant 6 : i32
    %42 = vector.broadcast %c6_i32_29 : i32 to vector<2x32xi32>
    %43 = arith.cmpi sge, %39, %42 : vector<2x32xi32>
    %c12_i32 = arith.constant 12 : i32
    %44 = vector.broadcast %c12_i32 : i32 to vector<2x32xi32>
    %45 = arith.cmpi slt, %39, %44 : vector<2x32xi32>
    %46 = arith.andi %43, %45 : vector<2x32xi1>
    %c12_i32_30 = arith.constant 12 : i32
    %47 = vector.broadcast %c12_i32_30 : i32 to vector<2x32xi32>
    %48 = arith.cmpi sge, %39, %47 : vector<2x32xi32>
    %c15_i32 = arith.constant 15 : i32
    %49 = vector.broadcast %c15_i32 : i32 to vector<2x32xi32>
    %50 = arith.cmpi slt, %39, %49 : vector<2x32xi32>
    %51 = arith.andi %48, %50 : vector<2x32xi1>
    %c15_i32_31 = arith.constant 15 : i32
    %52 = vector.broadcast %c15_i32_31 : i32 to vector<2x32xi32>
    %53 = arith.cmpi sge, %39, %52 : vector<2x32xi32>
    %c21_i32 = arith.constant 21 : i32
    %54 = vector.broadcast %c21_i32 : i32 to vector<2x32xi32>
    %55 = arith.cmpi slt, %39, %54 : vector<2x32xi32>
    %56 = arith.andi %53, %55 : vector<2x32xi1>
    %c15_i32_32 = arith.constant 15 : i32
    %57 = vector.broadcast %c15_i32_32 : i32 to vector<2x32xi32>
    %58 = arith.cmpi slt, %39, %57 : vector<2x32xi32>
    %cst_33 = arith.constant -1.000000e+30 : f32
    %59 = vector.broadcast %cst_33 : f32 to vector<2x32xf32>
    %60 = arith.select %41, %38, %59 : vector<2x32xi1>, vector<2x32xf32>
    %cst_34 = arith.constant dense<0xFF800000> : vector<2xf32>
    %61 = vector.multi_reduction <maximumf>, %60, %cst_34 [1] : vector<2x32xf32> to vector<2xf32>
    %62 = vector.shape_cast %61 : vector<2xf32> to vector<2x1xf32>
    %cst_35 = arith.constant -1.000000e+30 : f32
    %63 = vector.broadcast %cst_35 : f32 to vector<2x32xf32>
    %64 = arith.select %46, %38, %63 : vector<2x32xi1>, vector<2x32xf32>
    %cst_36 = arith.constant dense<0xFF800000> : vector<2xf32>
    %65 = vector.multi_reduction <maximumf>, %64, %cst_36 [1] : vector<2x32xf32> to vector<2xf32>
    %66 = vector.shape_cast %65 : vector<2xf32> to vector<2x1xf32>
    %cst_37 = arith.constant -1.000000e+30 : f32
    %67 = vector.broadcast %cst_37 : f32 to vector<2x32xf32>
    %68 = arith.select %51, %38, %67 : vector<2x32xi1>, vector<2x32xf32>
    %cst_38 = arith.constant dense<0xFF800000> : vector<2xf32>
    %69 = vector.multi_reduction <maximumf>, %68, %cst_38 [1] : vector<2x32xf32> to vector<2xf32>
    %70 = vector.shape_cast %69 : vector<2xf32> to vector<2x1xf32>
    %71 = vector.shape_cast %66 : vector<2x1xf32> to vector<2x1xf32>
    %72 = vector.broadcast %71 : vector<2x1xf32> to vector<2x32xf32>
    %73 = vector.shape_cast %70 : vector<2x1xf32> to vector<2x1xf32>
    %74 = vector.broadcast %73 : vector<2x1xf32> to vector<2x32xf32>
    %75 = arith.select %46, %72, %74 : vector<2x32xi1>, vector<2x32xf32>
    %76 = vector.shape_cast %62 : vector<2x1xf32> to vector<2x1xf32>
    %77 = vector.broadcast %76 : vector<2x1xf32> to vector<2x32xf32>
    %78 = arith.select %41, %77, %75 : vector<2x32xi1>, vector<2x32xf32>
    %79 = arith.subf %38, %78 : vector<2x32xf32>
    %cst_39 = arith.constant -1.000000e+30 : f32
    %80 = vector.broadcast %cst_39 : f32 to vector<2x32xf32>
    %81 = arith.select %58, %79, %80 : vector<2x32xi1>, vector<2x32xf32>
    %82 = math.exp %81 : vector<2x32xf32>
    %cst_40 = arith.constant 0.000000e+00 : f32
    %83 = vector.broadcast %cst_40 : f32 to vector<2x32xf32>
    %84 = arith.select %41, %82, %83 : vector<2x32xi1>, vector<2x32xf32>
    %cst_41 = arith.constant dense<0.000000e+00> : vector<2xf32>
    %85 = vector.multi_reduction <add>, %84, %cst_41 [1] : vector<2x32xf32> to vector<2xf32>
    %86 = vector.shape_cast %85 : vector<2xf32> to vector<2x1xf32>
    %87 = tpu.reciprocal %86 {approx = true} : vector<2x1xf32> -> vector<2x1xf32>
    %cst_42 = arith.constant 0.000000e+00 : f32
    %88 = vector.broadcast %cst_42 : f32 to vector<2x32xf32>
    %89 = arith.select %46, %82, %88 : vector<2x32xi1>, vector<2x32xf32>
    %cst_43 = arith.constant dense<0.000000e+00> : vector<2xf32>
    %90 = vector.multi_reduction <add>, %89, %cst_43 [1] : vector<2x32xf32> to vector<2xf32>
    %91 = vector.shape_cast %90 : vector<2xf32> to vector<2x1xf32>
    %92 = tpu.reciprocal %91 {approx = true} : vector<2x1xf32> -> vector<2x1xf32>
    %cst_44 = arith.constant 0.000000e+00 : f32
    %93 = vector.broadcast %cst_44 : f32 to vector<2x32xf32>
    %94 = arith.select %51, %82, %93 : vector<2x32xi1>, vector<2x32xf32>
    %cst_45 = arith.constant dense<0.000000e+00> : vector<2xf32>
    %95 = vector.multi_reduction <add>, %94, %cst_45 [1] : vector<2x32xf32> to vector<2xf32>
    %96 = vector.shape_cast %95 : vector<2xf32> to vector<2x1xf32>
    %97 = tpu.reciprocal %96 {approx = true} : vector<2x1xf32> -> vector<2x1xf32>
    %98 = vector.shape_cast %92 : vector<2x1xf32> to vector<2x1xf32>
    %99 = vector.broadcast %98 : vector<2x1xf32> to vector<2x32xf32>
    %100 = vector.shape_cast %97 : vector<2x1xf32> to vector<2x1xf32>
    %101 = vector.broadcast %100 : vector<2x1xf32> to vector<2x32xf32>
    %102 = arith.select %46, %99, %101 : vector<2x32xi1>, vector<2x32xf32>
    %103 = vector.shape_cast %87 : vector<2x1xf32> to vector<2x1xf32>
    %104 = vector.broadcast %103 : vector<2x1xf32> to vector<2x32xf32>
    %105 = arith.select %41, %104, %102 : vector<2x32xi1>, vector<2x32xf32>
    %106 = arith.mulf %82, %105 : vector<2x32xf32>
    %cst_46 = arith.constant 5.000000e-01 : f32
    %107 = vector.broadcast %cst_46 : f32 to vector<2x32xf32>
    %108 = arith.mulf %107, %38 : vector<2x32xf32>
    %109 = math.tanh %108 : vector<2x32xf32>
    %cst_47 = arith.constant 1.000000e+00 : f32
    %110 = vector.broadcast %cst_47 : f32 to vector<2x32xf32>
    %111 = arith.addf %109, %110 : vector<2x32xf32>
    %cst_48 = arith.constant 5.000000e-01 : f32
    %112 = vector.broadcast %cst_48 : f32 to vector<2x32xf32>
    %113 = arith.mulf %112, %111 : vector<2x32xf32>
    %cst_49 = arith.constant 0.000000e+00 : f32
    %114 = vector.broadcast %cst_49 : f32 to vector<2x32xf32>
    %115 = arith.select %56, %113, %114 : vector<2x32xi1>, vector<2x32xf32>
    %116 = arith.addf %106, %115 : vector<2x32xf32>
    %c0_50 = arith.constant 0 : index
    %c0_51 = arith.constant 0 : index
    %117 = vector.load %arg11[%c0_50, %c0_51] : memref<2x32xf32, #tpu.memory_space<vmem>>, vector<2x32xf32>
    tpu.vector_store %arg11[%c0_50, %c0_51], %116 {strides = array<i32>} : memref<2x32xf32, #tpu.memory_space<vmem>>, vector<2x32xf32>,
    return
  }
}

</mosaic_0001>

<llo_original>
// kernel: tpu_custom_call.1
$region0: #{tpu_custom_call.1}
  #allocation0 [shape = 'u32[]', space=smem, size = 0x4, offset = 0x4, fixed_abs, tag = 'smem constant byte address 0x4 - core index']
  #allocation1 [shape = 'u32[144,128]{1,0:T(1,128)}', space=vmem, size = 0x12000, scoped, tag = 'internal scratch']
  %s0 = inlined_call_operand.vmem [shape: f32[2,14], index: 0, kind: input, shape index: {}]
  %s1 = inlined_call_operand.vmem [shape: bf16[14,144], index: 1, kind: input, shape index: {}]
  %s2 = inlined_call_operand.vmem [shape: f32[1,144], index: 2, kind: input, shape index: {}]
  %s3 = inlined_call_operand.vmem [shape: bf16[144,144], index: 3, kind: input, shape index: {}]
  %s4 = inlined_call_operand.vmem [shape: f32[1,144], index: 4, kind: input, shape index: {}]
  %s5 = inlined_call_operand.hbm [shape: bf16[144,256], index: 5, kind: input, shape index: {}]
  %s6 = inlined_call_operand.vmem [shape: f32[1,256], index: 6, kind: input, shape index: {}]
  %s7 = inlined_call_operand.hbm [shape: bf16[256,256], index: 7, kind: input, shape index: {}]
  %s8 = inlined_call_operand.vmem [shape: f32[1,256], index: 8, kind: input, shape index: {}]
  %s9 = inlined_call_operand.vmem [shape: bf16[256,32], index: 9, kind: input, shape index: {}]
  %s10 = inlined_call_operand.vmem [shape: f32[1,32], index: 10, kind: input, shape index: {}]
  %s11 = inlined_call_operand.hbm [shape: f32[2,32], index: 11, kind: output, shape index: {}]
  %s12 = sld [smem:[#allocation0]]
  $region62: #{tpu_custom_call.1} parent=0
    _
  %s14 = ssub.s32 1, %s12
  %s15 = scalar_select 0, %s14, %s12
  $region1: #{tpu_custom_call.1} parent=0
    #allocation2 [shape = 'u8[73728]{0}', space=vmem, size = 0x12000, scoped, tag = 'input window, operand 5, single buffered']
    #allocation3 [shape = 's32[1]{0}', space=sflag, size = 0x4, scoped, tag = 'scoped memory for tpu_custom_call.1']
    #allocation4 [shape = 's32[1]{0}', space=sflag, size = 0x4, scoped, tag = 'scoped memory for tpu_custom_call.1']
    #allocation5 [shape = 'u8[131072]{0}', space=vmem, size = 0x20000, scoped, tag = 'input window, operand 7, single buffered']
    #allocation6 [shape = 's32[1]{0}', space=sflag, size = 0x4, scoped, tag = 'scoped memory for tpu_custom_call.1']
    #allocation7 [shape = 'u8[1024]{0}', space=vmem, size = 0x400, scoped, tag = 'output window, operand 0, single buffered']
    %16 = vsyncpa [#allocation3], 0
    %17 = vsyncpa [#allocation6], 0
    %18 = vsyncpa [#allocation4], 0
    // Predicated region
    $region2: #{tpu_custom_call.1} parent=1 // pred_check
      _
    $region3: #{tpu_custom_call.1} parent=1 // pred_check_branch
      %20 = sbr.rel (0) target = $region5
    $region4: #{tpu_custom_call.1} parent=1 // pred_region
      _
    $region5: #{tpu_custom_call.1} parent=1 // pred_fallthru
      _
    // Predicated region
    $region6: #{tpu_custom_call.1} parent=1 // pred_check
      _
    $region7: #{tpu_custom_call.1} parent=1 // pred_check_branch
      %22 = sbr.rel (0) target = $region9
    $region8: #{tpu_custom_call.1} parent=1 // pred_region
      _
    $region9: #{tpu_custom_call.1} parent=1 // pred_fallthru
      _
    // Predicated region
    $region10: #{tpu_custom_call.1} parent=1 // pred_check
      _
    $region11: #{tpu_custom_call.1} parent=1 // pred_check_branch
      %24 = sbr.rel (0) target = $region13
    $region12: #{tpu_custom_call.1} parent=1 // pred_region
      _
    $region13: #{tpu_custom_call.1} parent=1 // pred_fallthru
      _
    // Predicated region
    $region14: #{tpu_custom_call.1} parent=1 // pred_check
      _
    $region15: #{tpu_custom_call.1} parent=1 // pred_check_branch
      %26 = sbr.rel (0) target = $region17
    $region16: #{tpu_custom_call.1} parent=1 // pred_region
      _
    $region17: #{tpu_custom_call.1} parent=1 // pred_fallthru
      _
    // Predicated region
    $region18: #{tpu_custom_call.1} parent=1 // pred_check
      _
    $region19: #{tpu_custom_call.1} parent=1 // pred_check_branch
      %28 = sbr.rel (0) target = $region21
    $region20: #{tpu_custom_call.1} parent=1 // pred_region
      _
    $region21: #{tpu_custom_call.1} parent=1 // pred_fallthru
      _
    // Predicated region
    $region22: #{tpu_custom_call.1} parent=1 // pred_check
      _
    $region23: #{tpu_custom_call.1} parent=1 // pred_check_branch
      %30 = sbr.rel (0) target = $region25
    $region24: #{tpu_custom_call.1} parent=1 // pred_region
      %s32 = ssub.s32 2304, 2304
      %33 = vsyncadd [#allocation3], %s32
      %s34 = sshll.u32 [#allocation2], 4
      %s35 = int_to_ptr.vmem [resolvable:$true] %s34
      %40 = dma.hbm_to_vmem [thread:$0]  %s5, 2304, %s35, [#allocation3], 128, 128, 8
    $region25: #{tpu_custom_call.1} parent=1 // pred_fallthru
      _
    // Predicated region
    $region26: #{tpu_custom_call.1} parent=1 // pred_check
      _
    $region27: #{tpu_custom_call.1} parent=1 // pred_check_branch
      %42 = sbr.rel (0) target = $region29
    $region28: #{tpu_custom_call.1} parent=1 // pred_region
      _
    $region29: #{tpu_custom_call.1} parent=1 // pred_fallthru
      _
    // Predicated region
    $region30: #{tpu_custom_call.1} parent=1 // pred_check
      _
    $region31: #{tpu_custom_call.1} parent=1 // pred_check_branch
      %44 = sbr.rel (0) target = $region33
    $region32: #{tpu_custom_call.1} parent=1 // pred_region
      %s46 = ssub.s32 4096, 4096
      %47 = vsyncadd [#allocation6], %s46
      %s48 = sshll.u32 [#allocation5], 4
      %s49 = int_to_ptr.vmem [resolvable:$true] %s48
      %54 = dma.hbm_to_vmem [thread:$0]  %s7, 4096, %s49, [#allocation6], 128, 128, 8
    $region33: #{tpu_custom_call.1} parent=1 // pred_fallthru
      _
    // Predicated region
    $region34: #{tpu_custom_call.1} parent=1 // pred_check
      _
    $region35: #{tpu_custom_call.1} parent=1 // pred_check_branch
      %56 = sbr.rel (0) target = $region37
    $region36: #{tpu_custom_call.1} parent=1 // pred_region
      _
    $region37: #{tpu_custom_call.1} parent=1 // pred_fallthru
      _
    // Predicated region
    $region38: #{tpu_custom_call.1} parent=1 // pred_check
      _
    $region39: #{tpu_custom_call.1} parent=1 // pred_check_branch
      %58 = sbr.rel (0) target = $region41
    $region40: #{tpu_custom_call.1} parent=1 // pred_region
      _
    $region41: #{tpu_custom_call.1} parent=1 // pred_fallthru
      _
    // Predicated region
    $region42: #{tpu_custom_call.1} parent=1 // pred_check
      _
    $region43: #{tpu_custom_call.1} parent=1 // pred_check_branch
      %60 = sbr.rel (0) target = $region45
    $region44: #{tpu_custom_call.1} parent=1 // pred_region
      _
    $region45: #{tpu_custom_call.1} parent=1 // pred_fallthru
      _
    // Predicated region
    $region46: #{tpu_custom_call.1} parent=1 // pred_check
      _
    $region47: #{tpu_custom_call.1} parent=1 // pred_check_branch
      %62 = sbr.rel (0) target = $region49
    $region48: #{tpu_custom_call.1} parent=1 // pred_region
      %63 = dma.done [#allocation3], 2304
    $region49: #{tpu_custom_call.1} parent=1 // pred_fallthru
      _
    // Predicated region
    $region50: #{tpu_custom_call.1} parent=1 // pred_check
      _
    $region51: #{tpu_custom_call.1} parent=1 // pred_check_branch
      %65 = sbr.rel (0) target = $region53
    $region52: #{tpu_custom_call.1} parent=1 // pred_region
      %66 = dma.done [#allocation6], 4096
    $region53: #{tpu_custom_call.1} parent=1 // pred_fallthru
      _
    %v68 = vld [vmem:[%s0] sm:$0x3]
    %v69 = vpack.c.bf16 %v68, %v68
    %v70 = vld [vmem:[%s1] sm:$0xff]
    %v71 = vld [vmem:[%s1 + $0x8] sm:$0x77]
    %v72 = vld [vmem:[%s2] sm:$0x3]
    %v74 = vlaneseq
    %v75 = vshrl.u32 %v74, 7
    %v76 = vsub.s32 0, %v75
    %v77 = vrot.slane %v72, %v76
    %v78 = vlaneseq
    %v79 = vshrl.u32 %v78, 7
    %v80 = vsub.s32 1, %v79
    %v81 = vrot.slane %v72, %v80
    %v86 = vunpack.c.l.b16 %v70
    %v87 = vunpack.c.h.b16 %v70
    %v88 = vunpack.c.l.b16 %v71
    %v89 = vunpack.c.h.b16 %v71
    %v90 = vpack.c.b16 %v88, %v86
    %v91 = vpack.c.b16 %v89, %v87
    %vm92 = vcmask 113664
    %v94 = vsel %vm92, %v69, 0
    %vm96 = vcmask 1046528
    %v98 = vsel %vm96, %v90, 0
    %v101 = vsel %vm96, %v91, 0
    %103 = vmatprep.subr.bf16.mxu0 0
    %104 = vmatpush1.bf16.msra.mxu0 0
    %105 = vmatprep.subr.bf16.mxu0 0
    %106 = vmatpush1.bf16.msra.mxu0 0
    %107 = vmatprep.subr.bf16.mxu0 0
    %108 = vmatpush1.bf16.msra.mxu0 0
    %109 = vmatprep.subr.bf16.mxu0 0
    %110 = vmatpush1.bf16.msra.mxu0 0
    %111 = vmatprep.subr.bf16.mxu0 0
    %112 = vmatpush1.bf16.msra.mxu0 0
    %113 = vmatprep.subr.bf16.mxu0 0
    %114 = vmatpush1.bf16.msra.mxu0 0
    %115 = vmatprep.subr.bf16.mxu0 0
    %116 = vmatpush1.bf16.msra.mxu0 0
    %117 = vmatprep.subr.bf16.mxu0 %v101
    %118 = vmatpush1.bf16.msra.mxu0 %v98
    %119 = vmatprep.subr.bf16.mxu0 0
    %120 = vmatpush2.bf16.msra.mxu0 0
    %121 = vmatprep.subr.bf16.mxu0 0
    %122 = vmatpush2.bf16.msra.mxu0 0
    %123 = vmatprep.subr.bf16.mxu0 0
    %124 = vmatpush2.bf16.msra.mxu0 0
    %125 = vmatprep.subr.bf16.mxu0 0
    %126 = vmatpush2.bf16.msra.mxu0 0
    %127 = vmatprep.subr.bf16.mxu0 0
    %128 = vmatpush2.bf16.msra.mxu0 0
    %129 = vmatprep.subr.bf16.mxu0 0
    %130 = vmatpush2.bf16.msra.mxu0 0
    %131 = vmatprep.subr.bf16.mxu0 0
    %132 = vmatpush2.bf16.msra.mxu0 0
    %133 = vmatprep.subr.bf16.mxu0 0
    %134 = vmatpush2.bf16.msra.mxu0 0
    %135 = vmatprep.mubr.bf16.mxu0 0
    %136 = vmatmul.mubr.bf16.gmra.mxu0 %v94
    %v137 = vpop.f32.mrf.mxu0
    %v138 = vadd.f32 %v77, %v137
    %v139 = vpop.f32.mrf.mxu0
    %v140 = vadd.f32 %v81, %v139
    %v141 = vpop.f32.mrf.mxu0
    %v142 = vpop.f32.mrf.mxu0
    %143 = vdwg.mxu0
    %v144 = vmax.f32 %v138, 0.0
    %v145 = vmax.f32 %v140, 0.0
    %v146 = vpack.c.bf16 %v144, %v144
    %v147 = vpack.c.bf16 %v145, %v145
    %v148 = vld [vmem:[%s3] sm:$0xff]
    %v149 = vld [vmem:[%s3 + $0x8] sm:$0xff]
    %v150 = vld [vmem:[%s3 + $0x10] sm:$0xff]
    %v151 = vld [vmem:[%s3 + $0x18] sm:$0xff]
    %v152 = vld [vmem:[%s3 + $0x20] sm:$0xff]
    %v153 = vld [vmem:[%s3 + $0x28] sm:$0xff]
    %v154 = vld [vmem:[%s3 + $0x30] sm:$0xff]
    %v155 = vld [vmem:[%s3 + $0x38] sm:$0xff]
    %v156 = vld [vmem:[%s3 + $0x40] sm:$0xff]
    %v157 = vld [vmem:[%s3 + $0x48] sm:$0xff]
    %v158 = vld [vmem:[%s3 + $0x50] sm:$0xff]
    %v159 = vld [vmem:[%s3 + $0x58] sm:$0xff]
    %v160 = vld [vmem:[%s3 + $0x60] sm:$0xff]
    %v161 = vld [vmem:[%s3 + $0x68] sm:$0xff]
    %v162 = vld [vmem:[%s3 + $0x70] sm:$0xff]
    %v163 = vld [vmem:[%s3 + $0x78] sm:$0xff]
    %v164 = vld [vmem:[%s3 + $0x80] sm:$0xff]
    %v165 = vld [vmem:[%s3 + $0x88] sm:$0xff]
    %v166 = vld [vmem:[%s4] sm:$0x3]
    %v168 = vlaneseq
    %v169 = vshrl.u32 %v168, 7
    %v170 = vsub.s32 0, %v169
    %v171 = vrot.slane %v166, %v170
    %v172 = vlaneseq
    %v173 = vshrl.u32 %v172, 7
    %v174 = vsub.s32 1, %v173
    %v175 = vrot.slane %v166, %v174
    %v196 = vunpack.c.l.b16 %v148
    %v197 = vunpack.c.h.b16 %v148
    %v198 = vunpack.c.l.b16 %v149
    %v199 = vunpack.c.h.b16 %v149
    %v200 = vunpack.c.l.b16 %v150
    %v201 = vunpack.c.h.b16 %v150
    %v202 = vunpack.c.l.b16 %v151
    %v203 = vunpack.c.h.b16 %v151
    %v204 = vunpack.c.l.b16 %v152
    %v205 = vunpack.c.h.b16 %v152
    %v206 = vunpack.c.l.b16 %v153
    %v207 = vunpack.c.h.b16 %v153
    %v208 = vunpack.c.l.b16 %v154
    %v209 = vunpack.c.h.b16 %v154
    %v210 = vunpack.c.l.b16 %v155
    %v211 = vunpack.c.h.b16 %v155
    %v212 = vunpack.c.l.b16 %v156
    %v213 = vunpack.c.h.b16 %v156
    %v214 = vunpack.c.l.b16 %v157
    %v215 = vunpack.c.h.b16 %v157
    %v216 = vunpack.c.l.b16 %v158
    %v217 = vunpack.c.h.b16 %v158
    %v218 = vunpack.c.l.b16 %v159
    %v219 = vunpack.c.h.b16 %v159
    %v220 = vunpack.c.l.b16 %v160
    %v221 = vunpack.c.h.b16 %v160
    %v222 = vunpack.c.l.b16 %v161
    %v223 = vunpack.c.h.b16 %v161
    %v224 = vunpack.c.l.b16 %v162
    %v225 = vunpack.c.h.b16 %v162
    %v226 = vunpack.c.l.b16 %v163
    %v227 = vunpack.c.h.b16 %v163
    %v228 = vunpack.c.l.b16 %v164
    %v229 = vunpack.c.h.b16 %v164
    %v230 = vunpack.c.l.b16 %v165
    %v231 = vunpack.c.h.b16 %v165
    %v232 = vpack.c.b16 %v198, %v196
    %v233 = vpack.c.b16 %v199, %v197
    %v234 = vpack.c.b16 %v202, %v200
    %v235 = vpack.c.b16 %v203, %v201
    %v236 = vpack.c.b16 %v206, %v204
    %v237 = vpack.c.b16 %v207, %v205
    %v238 = vpack.c.b16 %v210, %v208
    %v239 = vpack.c.b16 %v211, %v209
    %v240 = vpack.c.b16 %v214, %v212
    %v241 = vpack.c.b16 %v215, %v213
    %v242 = vpack.c.b16 %v218, %v216
    %v243 = vpack.c.b16 %v219, %v217
    %v244 = vpack.c.b16 %v222, %v220
    %v245 = vpack.c.b16 %v223, %v221
    %v246 = vpack.c.b16 %v226, %v224
    %v247 = vpack.c.b16 %v227, %v225
    %v248 = vpack.c.b16 %v230, %v228
    %v249 = vpack.c.b16 %v231, %v229
    %vm268 = vcmask 130048
    %v270 = vsel %vm268, %v147, 0
    %272 = vmatprep.subr.bf16.mxu0 %v247
    %273 = vmatpush1.bf16.msra.mxu0 %v246
    %274 = vmatprep.subr.bf16.mxu0 %v245
    %275 = vmatpush1.bf16.msra.mxu0 %v244
    %276 = vmatprep.subr.bf16.mxu0 %v243
    %277 = vmatpush1.bf16.msra.mxu0 %v242
    %278 = vmatprep.subr.bf16.mxu0 %v241
    %279 = vmatpush1.bf16.msra.mxu0 %v240
    %280 = vmatprep.subr.bf16.mxu0 %v239
    %281 = vmatpush1.bf16.msra.mxu0 %v238
    %282 = vmatprep.subr.bf16.mxu0 %v237
    %283 = vmatpush1.bf16.msra.mxu0 %v236
    %284 = vmatprep.subr.bf16.mxu0 %v235
    %285 = vmatpush1.bf16.msra.mxu0 %v234
    %286 = vmatprep.subr.bf16.mxu0 %v233
    %287 = vmatpush1.bf16.msra.mxu0 %v232
    %288 = vmatprep.subr.bf16.mxu0 0
    %289 = vmatpush2.bf16.msra.mxu0 0
    %290 = vmatprep.subr.bf16.mxu0 0
    %291 = vmatpush2.bf16.msra.mxu0 0
    %292 = vmatprep.subr.bf16.mxu0 0
    %293 = vmatpush2.bf16.msra.mxu0 0
    %294 = vmatprep.subr.bf16.mxu0 0
    %295 = vmatpush2.bf16.msra.mxu0 0
    %296 = vmatprep.subr.bf16.mxu0 0
    %297 = vmatpush2.bf16.msra.mxu0 0
    %298 = vmatprep.subr.bf16.mxu0 0
    %299 = vmatpush2.bf16.msra.mxu0 0
    %300 = vmatprep.subr.bf16.mxu0 0
    %301 = vmatpush2.bf16.msra.mxu0 0
    %302 = vmatprep.subr.bf16.mxu0 %v249
    %303 = vmatpush2.bf16.msra.mxu0 %v248
    %304 = vmatprep.mubr.bf16.mxu0 %v270
    %305 = vmatmul.mubr.bf16.gmra.mxu0 %v146
    %v306 = vpop.f32.mrf.mxu0
    %v307 = vadd.f32 %v171, %v306
    %v308 = vpop.f32.mrf.mxu0
    %v309 = vadd.f32 %v175, %v308
    %v310 = vpop.f32.mrf.mxu0
    %v311 = vpop.f32.mrf.mxu0
    %312 = vdwg.mxu0
    %v313 = vmax.f32 %v307, 0.0
    %v314 = vmax.f32 %v309, 0.0
    %v315 = vpack.c.bf16 %v313, %v313
    %v316 = vpack.c.bf16 %v314, %v314
    %v317 = vld [vmem:[#allocation2] sm:$0xff]
    %v318 = vld [vmem:[#allocation2 + $0x8] sm:$0xff]
    %v319 = vld [vmem:[#allocation2 + $0x10] sm:$0xff]
    %v320 = vld [vmem:[#allocation2 + $0x18] sm:$0xff]
    %v321 = vld [vmem:[#allocation2 + $0x20] sm:$0xff]
    %v322 = vld [vmem:[#allocation2 + $0x28] sm:$0xff]
    %v323 = vld [vmem:[#allocation2 + $0x30] sm:$0xff]
    %v324 = vld [vmem:[#allocation2 + $0x38] sm:$0xff]
    %v325 = vld [vmem:[#allocation2 + $0x40] sm:$0xff]
    %v326 = vld [vmem:[#allocation2 + $0x48] sm:$0xff]
    %v327 = vld [vmem:[#allocation2 + $0x50] sm:$0xff]
    %v328 = vld [vmem:[#allocation2 + $0x58] sm:$0xff]
    %v329 = vld [vmem:[#allocation2 + $0x60] sm:$0xff]
    %v330 = vld [vmem:[#allocation2 + $0x68] sm:$0xff]
    %v331 = vld [vmem:[#allocation2 + $0x70] sm:$0xff]
    %v332 = vld [vmem:[#allocation2 + $0x78] sm:$0xff]
    %v333 = vld [vmem:[#allocation2 + $0x80] sm:$0xff]
    %v334 = vld [vmem:[#allocation2 + $0x88] sm:$0xff]
    %v335 = vld [vmem:[%s6] sm:$0x3]
    %v337 = vlaneseq
    %v338 = vshrl.u32 %v337, 7
    %v339 = vsub.s32 0, %v338
    %v340 = vrot.slane %v335, %v339
    %v341 = vlaneseq
    %v342 = vshrl.u32 %v341, 7
    %v343 = vsub.s32 1, %v342
    %v344 = vrot.slane %v335, %v343
    %v365 = vunpack.c.l.b16 %v317
    %v366 = vunpack.c.h.b16 %v317
    %v367 = vunpack.c.l.b16 %v318
    %v368 = vunpack.c.h.b16 %v318
    %v369 = vunpack.c.l.b16 %v319
    %v370 = vunpack.c.h.b16 %v319
    %v371 = vunpack.c.l.b16 %v320
    %v372 = vunpack.c.h.b16 %v320
    %v373 = vunpack.c.l.b16 %v321
    %v374 = vunpack.c.h.b16 %v321
    %v375 = vunpack.c.l.b16 %v322
    %v376 = vunpack.c.h.b16 %v322
    %v377 = vunpack.c.l.b16 %v323
    %v378 = vunpack.c.h.b16 %v323
    %v379 = vunpack.c.l.b16 %v324
    %v380 = vunpack.c.h.b16 %v324
    %v381 = vunpack.c.l.b16 %v325
    %v382 = vunpack.c.h.b16 %v325
    %v383 = vunpack.c.l.b16 %v326
    %v384 = vunpack.c.h.b16 %v326
    %v385 = vunpack.c.l.b16 %v327
    %v386 = vunpack.c.h.b16 %v327
    %v387 = vunpack.c.l.b16 %v328
    %v388 = vunpack.c.h.b16 %v328
    %v389 = vunpack.c.l.b16 %v329
    %v390 = vunpack.c.h.b16 %v329
    %v391 = vunpack.c.l.b16 %v330
    %v392 = vunpack.c.h.b16 %v330
    %v393 = vunpack.c.l.b16 %v331
    %v394 = vunpack.c.h.b16 %v331
    %v395 = vunpack.c.l.b16 %v332
    %v396 = vunpack.c.h.b16 %v332
    %v397 = vunpack.c.l.b16 %v333
    %v398 = vunpack.c.h.b16 %v333
    %v399 = vunpack.c.l.b16 %v334
    %v400 = vunpack.c.h.b16 %v334
    %v401 = vpack.c.b16 %v367, %v365
    %v402 = vpack.c.b16 %v368, %v366
    %v403 = vpack.c.b16 %v371, %v369
    %v404 = vpack.c.b16 %v372, %v370
    %v405 = vpack.c.b16 %v375, %v373
    %v406 = vpack.c.b16 %v376, %v374
    %v407 = vpack.c.b16 %v379, %v377
    %v408 = vpack.c.b16 %v380, %v378
    %v409 = vpack.c.b16 %v383, %v381
    %v410 = vpack.c.b16 %v384, %v382
    %v411 = vpack.c.b16 %v387, %v385
    %v412 = vpack.c.b16 %v388, %v386
    %v413 = vpack.c.b16 %v391, %v389
    %v414 = vpack.c.b16 %v392, %v390
    %v415 = vpack.c.b16 %v395, %v393
    %v416 = vpack.c.b16 %v396, %v394
    %v417 = vpack.c.b16 %v399, %v397
    %v418 = vpack.c.b16 %v400, %v398
    %v438 = vsel %vm268, %v316, 0
    %440 = vmatprep.subr.bf16.mxu0 %v416
    %441 = vmatpush1.bf16.msra.mxu0 %v415
    %442 = vmatprep.subr.bf16.mxu0 %v414
    %443 = vmatpush1.bf16.msra.mxu0 %v413
    %444 = vmatprep.subr.bf16.mxu0 %v412
    %445 = vmatpush1.bf16.msra.mxu0 %v411
    %446 = vmatprep.subr.bf16.mxu0 %v410
    %447 = vmatpush1.bf16.msra.mxu0 %v409
    %448 = vmatprep.subr.bf16.mxu0 %v408
    %449 = vmatpush1.bf16.msra.mxu0 %v407
    %450 = vmatprep.subr.bf16.mxu0 %v406
    %451 = vmatpush1.bf16.msra.mxu0 %v405
    %452 = vmatprep.subr.bf16.mxu0 %v404
    %453 = vmatpush1.bf16.msra.mxu0 %v403
    %454 = vmatprep.subr.bf16.mxu0 %v402
    %455 = vmatpush1.bf16.msra.mxu0 %v401
    %456 = vmatprep.subr.bf16.mxu0 0
    %457 = vmatpush2.bf16.msra.mxu0 0
    %458 = vmatprep.subr.bf16.mxu0 0
    %459 = vmatpush2.bf16.msra.mxu0 0
    %460 = vmatprep.subr.bf16.mxu0 0
    %461 = vmatpush2.bf16.msra.mxu0 0
    %462 = vmatprep.subr.bf16.mxu0 0
    %463 = vmatpush2.bf16.msra.mxu0 0
    %464 = vmatprep.subr.bf16.mxu0 0
    %465 = vmatpush2.bf16.msra.mxu0 0
    %466 = vmatprep.subr.bf16.mxu0 0
    %467 = vmatpush2.bf16.msra.mxu0 0
    %468 = vmatprep.subr.bf16.mxu0 0
    %469 = vmatpush2.bf16.msra.mxu0 0
    %470 = vmatprep.subr.bf16.mxu0 %v418
    %471 = vmatpush2.bf16.msra.mxu0 %v417
    %472 = vmatprep.mubr.bf16.mxu0 %v438
    %473 = vmatmul.mubr.bf16.gmra.mxu0 %v315
    %v474 = vpop.f32.mrf.mxu0
    %v475 = vadd.f32 %v340, %v474
    %v476 = vpop.f32.mrf.mxu0
    %v477 = vadd.f32 %v344, %v476
    %v478 = vpop.f32.mrf.mxu0
    %v479 = vpop.f32.mrf.mxu0
    %480 = vdwg.mxu0
    %v481 = vmax.f32 %v475, 0.0
    %v482 = vmax.f32 %v477, 0.0
    %v483 = vpack.c.bf16 %v481, %v481
    %v484 = vpack.c.bf16 %v482, %v482
    %v485 = vld [vmem:[#allocation5] sm:$0xff]
    %v486 = vld [vmem:[#allocation5 + $0x8] sm:$0xff]
    %v487 = vld [vmem:[#allocation5 + $0x10] sm:$0xff]
    %v488 = vld [vmem:[#allocation5 + $0x18] sm:$0xff]
    %v489 = vld [vmem:[#allocation5 + $0x20] sm:$0xff]
    %v490 = vld [vmem:[#allocation5 + $0x28] sm:$0xff]
    %v491 = vld [vmem:[#allocation5 + $0x30] sm:$0xff]
    %v492 = vld [vmem:[#allocation5 + $0x38] sm:$0xff]
    %v493 = vld [vmem:[#allocation5 + $0x40] sm:$0xff]
    %v494 = vld [vmem:[#allocation5 + $0x48] sm:$0xff]
    %v495 = vld [vmem:[#allocation5 + $0x50] sm:$0xff]
    %v496 = vld [vmem:[#allocation5 + $0x58] sm:$0xff]
    %v497 = vld [vmem:[#allocation5 + $0x60] sm:$0xff]
    %v498 = vld [vmem:[#allocation5 + $0x68] sm:$0xff]
    %v499 = vld [vmem:[#allocation5 + $0x70] sm:$0xff]
    %v500 = vld [vmem:[#allocation5 + $0x78] sm:$0xff]
    %v501 = vld [vmem:[#allocation5 + $0x80] sm:$0xff]
    %v502 = vld [vmem:[#allocation5 + $0x88] sm:$0xff]
    %v503 = vld [vmem:[#allocation5 + $0x90] sm:$0xff]
    %v504 = vld [vmem:[#allocation5 + $0x98] sm:$0xff]
    %v505 = vld [vmem:[#allocation5 + $0xa0] sm:$0xff]
    %v506 = vld [vmem:[#allocation5 + $0xa8] sm:$0xff]
    %v507 = vld [vmem:[#allocation5 + $0xb0] sm:$0xff]
    %v508 = vld [vmem:[#allocation5 + $0xb8] sm:$0xff]
    %v509 = vld [vmem:[#allocation5 + $0xc0] sm:$0xff]
    %v510 = vld [vmem:[#allocation5 + $0xc8] sm:$0xff]
    %v511 = vld [vmem:[#allocation5 + $0xd0] sm:$0xff]
    %v512 = vld [vmem:[#allocation5 + $0xd8] sm:$0xff]
    %v513 = vld [vmem:[#allocation5 + $0xe0] sm:$0xff]
    %v514 = vld [vmem:[#allocation5 + $0xe8] sm:$0xff]
    %v515 = vld [vmem:[#allocation5 + $0xf0] sm:$0xff]
    %v516 = vld [vmem:[#allocation5 + $0xf8] sm:$0xff]
    %v517 = vld [vmem:[%s8] sm:$0x3]
    %v519 = vlaneseq
    %v520 = vshrl.u32 %v519, 7
    %v521 = vsub.s32 0, %v520
    %v522 = vrot.slane %v517, %v521
    %v523 = vlaneseq
    %v524 = vshrl.u32 %v523, 7
    %v525 = vsub.s32 1, %v524
    %v526 = vrot.slane %v517, %v525
    %v561 = vunpack.c.l.b16 %v485
    %v562 = vunpack.c.h.b16 %v485
    %v563 = vunpack.c.l.b16 %v486
    %v564 = vunpack.c.h.b16 %v486
    %v565 = vunpack.c.l.b16 %v487
    %v566 = vunpack.c.h.b16 %v487
    %v567 = vunpack.c.l.b16 %v488
    %v568 = vunpack.c.h.b16 %v488
    %v569 = vunpack.c.l.b16 %v489
    %v570 = vunpack.c.h.b16 %v489
    %v571 = vunpack.c.l.b16 %v490
    %v572 = vunpack.c.h.b16 %v490
    %v573 = vunpack.c.l.b16 %v491
    %v574 = vunpack.c.h.b16 %v491
    %v575 = vunpack.c.l.b16 %v492
    %v576 = vunpack.c.h.b16 %v492
    %v577 = vunpack.c.l.b16 %v493
    %v578 = vunpack.c.h.b16 %v493
    %v579 = vunpack.c.l.b16 %v494
    %v580 = vunpack.c.h.b16 %v494
    %v581 = vunpack.c.l.b16 %v495
    %v582 = vunpack.c.h.b16 %v495
    %v583 = vunpack.c.l.b16 %v496
    %v584 = vunpack.c.h.b16 %v496
    %v585 = vunpack.c.l.b16 %v497
    %v586 = vunpack.c.h.b16 %v497
    %v587 = vunpack.c.l.b16 %v498
    %v588 = vunpack.c.h.b16 %v498
    %v589 = vunpack.c.l.b16 %v499
    %v590 = vunpack.c.h.b16 %v499
    %v591 = vunpack.c.l.b16 %v500
    %v592 = vunpack.c.h.b16 %v500
    %v593 = vunpack.c.l.b16 %v501
    %v594 = vunpack.c.h.b16 %v501
    %v595 = vunpack.c.l.b16 %v502
    %v596 = vunpack.c.h.b16 %v502
    %v597 = vunpack.c.l.b16 %v503
    %v598 = vunpack.c.h.b16 %v503
    %v599 = vunpack.c.l.b16 %v504
    %v600 = vunpack.c.h.b16 %v504
    %v601 = vunpack.c.l.b16 %v505
    %v602 = vunpack.c.h.b16 %v505
    %v603 = vunpack.c.l.b16 %v506
    %v604 = vunpack.c.h.b16 %v506
    %v605 = vunpack.c.l.b16 %v507
    %v606 = vunpack.c.h.b16 %v507
    %v607 = vunpack.c.l.b16 %v508
    %v608 = vunpack.c.h.b16 %v508
    %v609 = vunpack.c.l.b16 %v509
    %v610 = vunpack.c.h.b16 %v509
    %v611 = vunpack.c.l.b16 %v510
    %v612 = vunpack.c.h.b16 %v510
    %v613 = vunpack.c.l.b16 %v511
    %v614 = vunpack.c.h.b16 %v511
    %v615 = vunpack.c.l.b16 %v512
    %v616 = vunpack.c.h.b16 %v512
    %v617 = vunpack.c.l.b16 %v513
    %v618 = vunpack.c.h.b16 %v513
    %v619 = vunpack.c.l.b16 %v514
    %v620 = vunpack.c.h.b16 %v514
    %v621 = vunpack.c.l.b16 %v515
    %v622 = vunpack.c.h.b16 %v515
    %v623 = vunpack.c.l.b16 %v516
    %v624 = vunpack.c.h.b16 %v516
    %v625 = vpack.c.b16 %v563, %v561
    %v626 = vpack.c.b16 %v564, %v562
    %v627 = vpack.c.b16 %v567, %v565
    %v628 = vpack.c.b16 %v568, %v566
    %v629 = vpack.c.b16 %v571, %v569
    %v630 = vpack.c.b16 %v572, %v570
    %v631 = vpack.c.b16 %v575, %v573
    %v632 = vpack.c.b16 %v576, %v574
    %v633 = vpack.c.b16 %v579, %v577
    %v634 = vpack.c.b16 %v580, %v578
    %v635 = vpack.c.b16 %v583, %v581
    %v636 = vpack.c.b16 %v584, %v582
    %v637 = vpack.c.b16 %v587, %v585
    %v638 = vpack.c.b16 %v588, %v586
    %v639 = vpack.c.b16 %v591, %v589
    %v640 = vpack.c.b16 %v592, %v590
    %v641 = vpack.c.b16 %v595, %v593
    %v642 = vpack.c.b16 %v596, %v594
    %v643 = vpack.c.b16 %v599, %v597
    %v644 = vpack.c.b16 %v600, %v598
    %v645 = vpack.c.b16 %v603, %v601
    %v646 = vpack.c.b16 %v604, %v602
    %v647 = vpack.c.b16 %v607, %v605
    %v648 = vpack.c.b16 %v608, %v606
    %v649 = vpack.c.b16 %v611, %v609
    %v650 = vpack.c.b16 %v612, %v610
    %v651 = vpack.c.b16 %v615, %v613
    %v652 = vpack.c.b16 %v616, %v614
    %v653 = vpack.c.b16 %v619, %v617
    %v654 = vpack.c.b16 %v620, %v618
    %v655 = vpack.c.b16 %v623, %v621
    %v656 = vpack.c.b16 %v624, %v622
    %689 = vmatprep.subr.bf16.mxu0 %v640
    %690 = vmatpush1.bf16.msra.mxu0 %v639
    %691 = vmatprep.subr.bf16.mxu0 %v638
    %692 = vmatpush1.bf16.msra.mxu0 %v637
    %693 = vmatprep.subr.bf16.mxu0 %v636
    %694 = vmatpush1.bf16.msra.mxu0 %v635
    %695 = vmatprep.subr.bf16.mxu0 %v634
    %696 = vmatpush1.bf16.msra.mxu0 %v633
    %697 = vmatprep.subr.bf16.mxu0 %v632
    %698 = vmatpush1.bf16.msra.mxu0 %v631
    %699 = vmatprep.subr.bf16.mxu0 %v630
    %700 = vmatpush1.bf16.msra.mxu0 %v629
    %701 = vmatprep.subr.bf16.mxu0 %v628
    %702 = vmatpush1.bf16.msra.mxu0 %v627
    %703 = vmatprep.subr.bf16.mxu0 %v626
    %704 = vmatpush1.bf16.msra.mxu0 %v625
    %705 = vmatprep.subr.bf16.mxu0 %v656
    %706 = vmatpush2.bf16.msra.mxu0 %v655
    %707 = vmatprep.subr.bf16.mxu0 %v654
    %708 = vmatpush2.bf16.msra.mxu0 %v653
    %709 = vmatprep.subr.bf16.mxu0 %v652
    %710 = vmatpush2.bf16.msra.mxu0 %v651
    %711 = vmatprep.subr.bf16.mxu0 %v650
    %712 = vmatpush2.bf16.msra.mxu0 %v649
    %713 = vmatprep.subr.bf16.mxu0 %v648
    %714 = vmatpush2.bf16.msra.mxu0 %v647
    %715 = vmatprep.subr.bf16.mxu0 %v646
    %716 = vmatpush2.bf16.msra.mxu0 %v645
    %717 = vmatprep.subr.bf16.mxu0 %v644
    %718 = vmatpush2.bf16.msra.mxu0 %v643
    %719 = vmatprep.subr.bf16.mxu0 %v642
    %720 = vmatpush2.bf16.msra.mxu0 %v641
    %721 = vmatprep.mubr.bf16.mxu0 %v484
    %722 = vmatmul.mubr.bf16.gmra.mxu0 %v483
    %v723 = vpop.f32.mrf.mxu0
    %v724 = vadd.f32 %v522, %v723
    %v725 = vpop.f32.mrf.mxu0
    %v726 = vadd.f32 %v526, %v725
    %v727 = vpop.f32.mrf.mxu0
    %v728 = vpop.f32.mrf.mxu0
    %729 = vdwg.mxu0
    %v730 = vmax.f32 %v724, 0.0
    %v731 = vmax.f32 %v726, 0.0
    %v732 = vpack.c.bf16 %v730, %v730
    %v733 = vpack.c.bf16 %v731, %v731
    %v734 = vld [vmem:[%s9] sm:$0xf]
    %v735 = vld [vmem:[%s9 + $0x4] sm:$0xf]
    %v736 = vld [vmem:[%s9 + $0x8] sm:$0xf]
    %v737 = vld [vmem:[%s9 + $0xc] sm:$0xf]
    %v738 = vld [vmem:[%s9 + $0x10] sm:$0xf]
    %v739 = vld [vmem:[%s9 + $0x14] sm:$0xf]
    %v740 = vld [vmem:[%s9 + $0x18] sm:$0xf]
    %v741 = vld [vmem:[%s9 + $0x1c] sm:$0xf]
    %v742 = vld [vmem:[%s9 + $0x20] sm:$0xf]
    %v743 = vld [vmem:[%s9 + $0x24] sm:$0xf]
    %v744 = vld [vmem:[%s9 + $0x28] sm:$0xf]
    %v745 = vld [vmem:[%s9 + $0x2c] sm:$0xf]
    %v746 = vld [vmem:[%s9 + $0x30] sm:$0xf]
    %v747 = vld [vmem:[%s9 + $0x34] sm:$0xf]
    %v748 = vld [vmem:[%s9 + $0x38] sm:$0xf]
    %v749 = vld [vmem:[%s9 + $0x3c] sm:$0xf]
    %v750 = vld [vmem:[%s9 + $0x40] sm:$0xf]
    %v751 = vld [vmem:[%s9 + $0x44] sm:$0xf]
    %v752 = vld [vmem:[%s9 + $0x48] sm:$0xf]
    %v753 = vld [vmem:[%s9 + $0x4c] sm:$0xf]
    %v754 = vld [vmem:[%s9 + $0x50] sm:$0xf]
    %v755 = vld [vmem:[%s9 + $0x54] sm:$0xf]
    %v756 = vld [vmem:[%s9 + $0x58] sm:$0xf]
    %v757 = vld [vmem:[%s9 + $0x5c] sm:$0xf]
    %v758 = vld [vmem:[%s9 + $0x60] sm:$0xf]
    %v759 = vld [vmem:[%s9 + $0x64] sm:$0xf]
    %v760 = vld [vmem:[%s9 + $0x68] sm:$0xf]
    %v761 = vld [vmem:[%s9 + $0x6c] sm:$0xf]
    %v762 = vld [vmem:[%s9 + $0x70] sm:$0xf]
    %v763 = vld [vmem:[%s9 + $0x74] sm:$0xf]
    %v764 = vld [vmem:[%s9 + $0x78] sm:$0xf]
    %v765 = vld [vmem:[%s9 + $0x7c] sm:$0xf]
    %v766 = vld [vmem:[%s10] sm:$0x1]
    %v768 = vlaneseq
    %v769 = vshrl.u32 %v768, 7
    %v770 = vsub.s32 0, %v769
    %v771 = vrot.slane %v766, %v770
    %v805 = vunpack.c.l.b16 %v734
    %v806 = vunpack.c.l.b16 %v735
    %v807 = vunpack.c.l.b16 %v736
    %v808 = vunpack.c.l.b16 %v737
    %v809 = vunpack.c.l.b16 %v738
    %v810 = vunpack.c.l.b16 %v739
    %v811 = vunpack.c.l.b16 %v740
    %v812 = vunpack.c.l.b16 %v741
    %v813 = vunpack.c.l.b16 %v742
    %v814 = vunpack.c.l.b16 %v743
    %v815 = vunpack.c.l.b16 %v744
    %v816 = vunpack.c.l.b16 %v745
    %v817 = vunpack.c.l.b16 %v746
    %v818 = vunpack.c.l.b16 %v747
    %v819 = vunpack.c.l.b16 %v748
    %v820 = vunpack.c.l.b16 %v749
    %v821 = vunpack.c.l.b16 %v750
    %v822 = vunpack.c.l.b16 %v751
    %v823 = vunpack.c.l.b16 %v752
    %v824 = vunpack.c.l.b16 %v753
    %v825 = vunpack.c.l.b16 %v754
    %v826 = vunpack.c.l.b16 %v755
    %v827 = vunpack.c.l.b16 %v756
    %v828 = vunpack.c.l.b16 %v757
    %v829 = vunpack.c.l.b16 %v758
    %v830 = vunpack.c.l.b16 %v759
    %v831 = vunpack.c.l.b16 %v760
    %v832 = vunpack.c.l.b16 %v761
    %v833 = vunpack.c.l.b16 %v762
    %v834 = vunpack.c.l.b16 %v763
    %v835 = vunpack.c.l.b16 %v764
    %v836 = vunpack.c.l.b16 %v765
    %v837 = vpack.c.b16 %v806, %v805
    %v838 = vpack.c.b16 %v808, %v807
    %v839 = vpack.c.b16 %v810, %v809
    %v840 = vpack.c.b16 %v812, %v811
    %v841 = vpack.c.b16 %v814, %v813
    %v842 = vpack.c.b16 %v816, %v815
    %v843 = vpack.c.b16 %v818, %v817
    %v844 = vpack.c.b16 %v820, %v819
    %v845 = vpack.c.b16 %v822, %v821
    %v846 = vpack.c.b16 %v824, %v823
    %v847 = vpack.c.b16 %v826, %v825
    %v848 = vpack.c.b16 %v828, %v827
    %v849 = vpack.c.b16 %v830, %v829
    %v850 = vpack.c.b16 %v832, %v831
    %v851 = vpack.c.b16 %v834, %v833
    %v852 = vpack.c.b16 %v836, %v835
    %869 = vmatprep.subr.bf16.mxu0 0
    %870 = vmatpush1.bf16.msra.mxu0 %v844
    %871 = vmatprep.subr.bf16.mxu0 0
    %872 = vmatpush1.bf16.msra.mxu0 %v843
    %873 = vmatprep.subr.bf16.mxu0 0
    %874 = vmatpush1.bf16.msra.mxu0 %v842
    %875 = vmatprep.subr.bf16.mxu0 0
    %876 = vmatpush1.bf16.msra.mxu0 %v841
    %877 = vmatprep.subr.bf16.mxu0 0
    %878 = vmatpush1.bf16.msra.mxu0 %v840
    %879 = vmatprep.subr.bf16.mxu0 0
    %880 = vmatpush1.bf16.msra.mxu0 %v839
    %881 = vmatprep.subr.bf16.mxu0 0
    %882 = vmatpush1.bf16.msra.mxu0 %v838
    %883 = vmatprep.subr.bf16.mxu0 0
    %884 = vmatpush1.bf16.msra.mxu0 %v837
    %885 = vmatprep.subr.bf16.mxu0 0
    %886 = vmatpush2.bf16.msra.mxu0 %v852
    %887 = vmatprep.subr.bf16.mxu0 0
    %888 = vmatpush2.bf16.msra.mxu0 %v851
    %889 = vmatprep.subr.bf16.mxu0 0
    %890 = vmatpush2.bf16.msra.mxu0 %v850
    %891 = vmatprep.subr.bf16.mxu0 0
    %892 = vmatpush2.bf16.msra.mxu0 %v849
    %893 = vmatprep.subr.bf16.mxu0 0
    %894 = vmatpush2.bf16.msra.mxu0 %v848
    %895 = vmatprep.subr.bf16.mxu0 0
    %896 = vmatpush2.bf16.msra.mxu0 %v847
    %897 = vmatprep.subr.bf16.mxu0 0
    %898 = vmatpush2.bf16.msra.mxu0 %v846
    %899 = vmatprep.subr.bf16.mxu0 0
    %900 = vmatpush2.bf16.msra.mxu0 %v845
    %901 = vmatprep.mubr.bf16.mxu0 %v733
    %902 = vmatmul.mubr.bf16.gmra.mxu0 %v732
    %v903 = vpop.f32.mrf.mxu0
    %v904 = vadd.f32 %v771, %v903
    %v905 = vpop.f32.mrf.mxu0
    %v906 = vpop.f32.mrf.mxu0
    %v907 = vpop.f32.mrf.mxu0
    %908 = vdwg.mxu0
    %v909 = vlaneseq
    %v910 = vand.u32 %v909, 127
    %vm911 = vcmp.lt.s32.totalorder %v910, 6
    %vm912 = vcmp.ge.s32.totalorder %v910, 6
    %vm913 = vcmp.lt.s32.totalorder %v910, 12
    %vm914 = vmand %vm912, %vm913
    %vm915 = vcmp.ge.s32.totalorder %v910, 12
    %vm916 = vcmp.lt.s32.totalorder %v910, 15
    %vm917 = vmand %vm915, %vm916
    %vm918 = vcmp.ge.s32.totalorder %v910, 15
    %vm919 = vcmp.lt.s32.totalorder %v910, 21
    %vm920 = vmand %vm918, %vm919
    %v921 = vsel %vm911, %v904, -1e+30
    %vm922 = vcmask 254976
    %v923 = vsel %vm922, %v921, -inf
    %924 = vmax.xlane.f32.xlu0 %v923
    %v925 = vpop.xlane.xlu0 %924
    %v926 = vsel %vm914, %v904, -1e+30
    %v927 = vsel %vm922, %v926, -inf
    %928 = vmax.xlane.f32.xlu0 %v927
    %v929 = vpop.xlane.xlu0 %928
    %v930 = vsel %vm917, %v904, -1e+30
    %v931 = vsel %vm922, %v930, -inf
    %932 = vmax.xlane.f32.xlu0 %v931
    %v933 = vpop.xlane.xlu0 %932
    %v934 = vsel %vm914, %v929, %v933
    %v935 = vsel %vm911, %v925, %v934
    %v936 = vsub.f32 %v904, %v935
    %v937 = vsel %vm916, %v936, -1e+30
    %v938 = vmul.f32 %v937, 1.442695
    %v939 = vpow.pop %v938
    %v940 = vsel %vm911, %v939, 0.0
    %v941 = vsel %vm922, %v940, 0.0
    %942 = vadd.xlane.f32.xlu0 %v941
    %v943 = vpop.xlane.xlu0 %942
    %v944 = vrcp.pop %v943
    %v945 = vsel %vm914, %v939, 0.0
    %v946 = vsel %vm922, %v945, 0.0
    %947 = vadd.xlane.f32.xlu0 %v946
    %v948 = vpop.xlane.xlu0 %947
    %v949 = vrcp.pop %v948
    %v950 = vsel %vm917, %v939, 0.0
    %v951 = vsel %vm922, %v950, 0.0
    %952 = vadd.xlane.f32.xlu0 %v951
    %v953 = vpop.xlane.xlu0 %952
    %v954 = vrcp.pop %v953
    %v955 = vsel %vm914, %v949, %v954
    %v956 = vsel %vm911, %v944, %v955
    %v957 = vmul.f32 %v939, %v956
    %v958 = vmul.f32 %v904, 0.5
    %v959 = vtanh.pop %v958
    %v960 = vadd.f32 %v959, 1.0
    %v961 = vmul.f32 %v960, 0.5
    %v962 = vsel %vm920, %v961, 0.0
    %v963 = vadd.f32 %v957, %v962
    %964 = vst.msk [vmem:[#allocation7] sm:$0x3] %vm922, %v963
    // Predicated region
    $region54: #{tpu_custom_call.1} parent=1 // pred_check
      _
    $region55: #{tpu_custom_call.1} parent=1 // pred_check_branch
      %966 = sbr.rel (0) target = $region57
    $region56: #{tpu_custom_call.1} parent=1 // pred_region
      %s968 = ssub.s32 32, 32
      %969 = vsyncadd [#allocation4], %s968
      %s971 = sshll.u32 [#allocation7], 4
      %s972 = int_to_ptr.vmem [resolvable:$true] %s971
      %974 = dma.vmem_to_hbm [thread:$0]  %s972, 32, %s11, [#allocation4]
    $region57: #{tpu_custom_call.1} parent=1 // pred_fallthru
      _
    // Predicated region
    $region58: #{tpu_custom_call.1} parent=1 // pred_check
      _
    $region59: #{tpu_custom_call.1} parent=1 // pred_check_branch
      %976 = sbr.rel (0) target = $region61
    $region60: #{tpu_custom_call.1} parent=1 // pred_region
      %977 = dma.done [#allocation4], 32
    $region61: #{tpu_custom_call.1} parent=1 // pred_fallthru
      _
    %978 = vsyncpa [#allocation3], 1
    %979 = vsyncpa [#allocation6], 1
    %980 = vsyncpa [#allocation4], 1

</llo_original>
